<compile_context>
chip_gen: v5e
topology: v5e:2x2
jax: 0.10.0
libtpu: 0.0.40
codegen_flags: <defaults>
</compile_context>

<pallas_src>
import functools
import math

import jax
import jax.numpy as jnp
from jax.experimental import pallas as pl
from jax.experimental.pallas import tpu as pltpu


def _round_up(v, m):
    return ((v + m - 1) // m) * m


def _tensorcores_per_chip():
    """Best-effort host-side query: only v7x (2 TCs/chip) benefits from forcing a
    balanced >=2-step 'parallel' grid; on v5e/v6e the grid is a serial loop."""
    try:
        kind = (jax.devices()[0].device_kind or "").lower()
    except Exception:
        return 1
    return 2 if "v7" in kind else 1


def _mlp_kernel(xT_ref, w1_ref, w2_ref, w3_ref, w4_ref, b_ref, oT_ref, *, hp, op):
    """Fused 4-layer MLP on one batch-column tile (batch on the lane axis).

    xT_ref : (in_p, tm)   matmul dtype (bf16 or f32), tile of feature-major input
    w{k}   : torch layout (out_p, in_p), matmul dtype, zero-padded to x8 rows/cols
    b_ref  : (3*hp + op, 1) f32 -- the four biases stacked, zero-padded
    oT_ref : (op, tm)     out dtype, op = out_size rounded up to 8 sublanes
    """
    f32 = jnp.float32

    b1 = b_ref[pl.ds(0 * hp, hp), :]
    b2 = b_ref[pl.ds(1 * hp, hp), :]
    b3 = b_ref[pl.ds(2 * hp, hp), :]
    b4 = b_ref[pl.ds(3 * hp, op), :]

    x = xT_ref[...]
    cdt = x.dtype                      # MXU-input dtype; epilogue stays f32

    h = jnp.dot(w1_ref[...], x, preferred_element_type=f32) + b1          # (hp, tm)
    h = jnp.maximum(h, 0.0)
    h = jnp.dot(w2_ref[...], h.astype(cdt), preferred_element_type=f32) + b2
    h = jnp.maximum(h, 0.0)
    h = jnp.dot(w3_ref[...], h.astype(cdt), preferred_element_type=f32) + b3
    h = jnp.maximum(h, 0.0)
    out = jnp.dot(w4_ref[...], h.astype(cdt), preferred_element_type=f32) + b4  # (op, tm)
    oT_ref[...] = out.astype(oT_ref.dtype)


def _pad2d(a, rows, cols, dtype):
    a = a.astype(dtype)
    return jnp.pad(a, ((0, rows - a.shape[0]), (0, cols - a.shape[1])))


@functools.partial(jax.jit,
                   static_argnames=("block_cols", "use_bf16_matmul", "out_dtype"))
def mlp_forward_featmajor(xT, params, block_cols=4096, use_bf16_matmul=True,
                          out_dtype=None):
    """Feature-major entry point.

    xT: (input_size, N)  ->  returns (out_size, N) in `out_dtype` (default xT.dtype).
    Keeping data in this layout across calls avoids the per-call transpose passes
    of `mlp_forward` (an extra HBM read+write of x and of the output).
    """
    in_size, n = xT.shape
    hidden = params["w1"].shape[0]
    out_size = params["w4"].shape[0]
    odt = jnp.dtype(out_dtype) if out_dtype is not None else xT.dtype
    mm_dtype = jnp.bfloat16 if use_bf16_matmul else xT.dtype

    in_p = _round_up(in_size, 8)
    hp = _round_up(hidden, 8)
    op = _round_up(out_size, 8)

    # ---- batch (lane) tiling: balanced, generation-aware --------------------
    n128 = _round_up(max(n, 1), 128)
    blk = max(128, _round_up(block_cols, 128))
    steps = -(-n128 // blk)                     # ceil
    n_tc = _tensorcores_per_chip()
    if n_tc >= 2:
        if steps == 1 and n128 >= 2 * 2048:
            steps = 2                           # megacore split only when each half is big
        elif 1 < steps < 8 and steps % 2 == 1:
            steps += 1                          # even step count -> balanced TC load
    tm = _round_up(-(-n128 // steps), 128)      # ceil-balanced tile, x128 lanes
    n_pad = steps * tm

    # ---- operands (zero-padded to x8 tiles; weights/biases are one-time DMAs) ----
    x_p = _pad2d(xT, in_p, n_pad, mm_dtype)
    w1 = _pad2d(params["w1"], hp, in_p, mm_dtype)
    w2 = _pad2d(params["w2"], hp, hp, mm_dtype)
    w3 = _pad2d(params["w3"], hp, hp, mm_dtype)
    w4 = _pad2d(params["w4"], op, hp, mm_dtype)
    b_all = jnp.concatenate(
        [_pad2d(params["b1"], hp, 1, jnp.float32),
         _pad2d(params["b2"], hp, 1, jnp.float32),
         _pad2d(params["b3"], hp, 1, jnp.float32),
         _pad2d(params["b4"], op, 1, jnp.float32)],
        axis=0)                                                  # (3*hp + op, 1) f32

    kernel = functools.partial(_mlp_kernel, hp=hp, op=op)

    def rep(shape):   # whole (tiny) constant tensor, same block every grid step
        return pl.BlockSpec(shape, lambda i: (0,) * len(shape))

    oT = pl.pallas_call(
        kernel,
        out_shape=jax.ShapeDtypeStruct((op, n_pad), odt),
        grid_spec=pltpu.PrefetchScalarGridSpec(
            num_scalar_prefetch=0,
            grid=(steps,),
            in_specs=[
                pl.BlockSpec((in_p, tm), lambda i: (0, i)),      # streamed batch columns
                rep(w1.shape), rep(w2.shape), rep(w3.shape), rep(w4.shape),
                rep(b_all.shape),
            ],
            out_specs=pl.BlockSpec((op, tm), lambda i: (0, i)),
        ),
        compiler_params=pltpu.CompilerParams(
            dimension_semantics=("parallel",),
        ),
    )(x_p, w1, w2, w3, w4, b_all)

    return oT[:out_size, :n]


@functools.partial(jax.jit, static_argnames=("block_cols", "use_bf16_matmul"))
def mlp_forward(x, params, block_cols=4096, use_bf16_matmul=True):
    """Standard torch-like interface: x (N, input_size) -> (N, out_size) in x.dtype.

    Note: this adds one transpose pass over x and over the output per call; for
    throughput at scale keep data feature-major and call mlp_forward_featmajor.
    """
    yT = mlp_forward_featmajor(x.T, params, block_cols=block_cols,
                               use_bf16_matmul=use_bf16_matmul, out_dtype=x.dtype)
    return yT.T


def init_mlp_params(key, input_size, output_size, hidden_size, dtype=jnp.float32):
    """torch.nn.Linear default init U(-1/sqrt(fan_in), 1/sqrt(fan_in)); torch layout (out, in)."""
    dims = [(hidden_size, input_size),
            (hidden_size, hidden_size),
            (hidden_size, hidden_size),
            (output_size, hidden_size)]
    params = {}
    keys = jax.random.split(key, 2 * len(dims))
    for idx, (fan_out, fan_in) in enumerate(dims):
        bound = 1.0 / math.sqrt(fan_in)
        params[f"w{idx + 1}"] = jax.random.uniform(
            keys[2 * idx], (fan_out, fan_in), dtype, minval=-bound, maxval=bound)
        params[f"b{idx + 1}"] = jax.random.uniform(
            keys[2 * idx + 1], (fan_out, 1), dtype, minval=-bound, maxval=bound)
    return params


def mlp_reference(x, params, matmul_dtype=None):
    """Pure-JAX reference (torch semantics). matmul_dtype=bf16 mirrors the kernel's MXU inputs."""
    def linear(h, w, b):
        if matmul_dtype is not None:
            h = h.astype(matmul_dtype)
            w = w.astype(matmul_dtype)
        y = jnp.dot(h, w.T, preferred_element_type=jnp.float32)
        return y + b.reshape(1, -1).astype(jnp.float32)

    h = jnp.maximum(linear(x, params["w1"], params["b1"]), 0.0)
    h = jnp.maximum(linear(h, params["w2"], params["b2"]), 0.0)
    h = jnp.maximum(linear(h, params["w3"], params["b3"]), 0.0)
    return linear(h, params["w4"], params["b4"])


if __name__ == "__main__":
    key = jax.random.PRNGKey(0)
    k_params, k_x = jax.random.split(key)

    # Small shapes consistent with the module: N tracks/hits x features -> hidden -> output.
    batch = 300          # not a multiple of 128: exercises padding and the grid policy
    input_size = 8
    hidden_size = 32
    output_size = 4

    params = init_mlp_params(k_params, input_size, output_size, hidden_size)
    x = jax.random.normal(k_x, (batch, input_size), jnp.float32)

    out = jax.block_until_ready(mlp_forward(x, params))
    assert out.shape == (batch, output_size)
    assert out.dtype == x.dtype

    # Feature-major path must agree with the standard path.
    out_fm = jax.block_until_ready(
        mlp_forward_featmajor(x.T, params, out_dtype=x.dtype))
    assert out_fm.shape == (output_size, batch)
    assert jnp.allclose(out, out_fm.T, atol=0.0, rtol=0.0), "layout paths disagree"

    # Semantics check vs the f32 torch-equivalent reference (loose tol: bf16 MXU inputs).
    ref_f32 = mlp_reference(x, params)
    assert jnp.allclose(out, ref_f32, atol=5e-2, rtol=5e-2), "mismatch vs f32 reference"

    # Tight check vs a reference matching the kernel's bf16-input / f32-accumulate matmuls.
    ref_bf16 = mlp_reference(x, params, matmul_dtype=jnp.bfloat16)
    assert jnp.allclose(out, ref_bf16, atol=1e-3, rtol=1e-3), "mismatch vs bf16-matched reference"

    print("KERNEL_OK")
</pallas_src>

<mosaic_0001>
module attributes {stable_mosaic.version = 11 : i64} {
  func.func @_mlp_kernel(%arg0: i32, %arg1: memref<8x384xbf16, #tpu.memory_space<vmem>>, %arg2: memref<32x8xbf16, #tpu.memory_space<vmem>>, %arg3: memref<32x32xbf16, #tpu.memory_space<vmem>>, %arg4: memref<32x32xbf16, #tpu.memory_space<vmem>>, %arg5: memref<8x32xbf16, #tpu.memory_space<vmem>>, %arg6: memref<104x1xf32, #tpu.memory_space<vmem>>, %arg7: memref<8x384xf32, #tpu.memory_space<vmem>>) attributes {dimension_semantics = [#tpu.dimension_semantics<parallel>], iteration_bounds = array<i64: 1>, scalar_prefetch = 0 : i64, scratch_operands = 0 : i64, tpu.core_type = #tpu.core_type<tc>, window_params = [{transform_indices = @transform_0, window_bounds = array<i64: 8, 384>}, {pipeline_mode = #tpu.pipeline_mode<synchronous>, transform_indices = @transform_1, window_bounds = array<i64: 32, 8>}, {pipeline_mode = #tpu.pipeline_mode<synchronous>, transform_indices = @transform_2, window_bounds = array<i64: 32, 32>}, {pipeline_mode = #tpu.pipeline_mode<synchronous>, transform_indices = @transform_3, window_bounds = array<i64: 32, 32>}, {pipeline_mode = #tpu.pipeline_mode<synchronous>, transform_indices = @transform_4, window_bounds = array<i64: 8, 32>}, {pipeline_mode = #tpu.pipeline_mode<synchronous>, transform_indices = @transform_5, window_bounds = array<i64: 104, 1>}, {transform_indices = @transform_6, window_bounds = array<i64: 8, 384>}]} {
    %c0 = arith.constant 0 : index
    %c0_0 = arith.constant 0 : index
    %0 = vector.load %arg6[%c0, %c0_0] : memref<104x1xf32, #tpu.memory_space<vmem>>, vector<32x1xf32>
    %c32 = arith.constant 32 : index
    %c0_1 = arith.constant 0 : index
    %1 = vector.load %arg6[%c32, %c0_1] : memref<104x1xf32, #tpu.memory_space<vmem>>, vector<32x1xf32>
    %c64 = arith.constant 64 : index
    %c0_2 = arith.constant 0 : index
    %2 = vector.load %arg6[%c64, %c0_2] : memref<104x1xf32, #tpu.memory_space<vmem>>, vector<32x1xf32>
    %c96 = arith.constant 96 : index
    %c0_3 = arith.constant 0 : index
    %3 = vector.load %arg6[%c96, %c0_3] : memref<104x1xf32, #tpu.memory_space<vmem>>, vector<8x1xf32>
    %c0_4 = arith.constant 0 : index
    %c0_5 = arith.constant 0 : index
    %4 = vector.load %arg1[%c0_4, %c0_5] : memref<8x384xbf16, #tpu.memory_space<vmem>>, vector<8x384xbf16>
    %c0_6 = arith.constant 0 : index
    %c0_7 = arith.constant 0 : index
    %5 = vector.load %arg2[%c0_6, %c0_7] : memref<32x8xbf16, #tpu.memory_space<vmem>>, vector<32x8xbf16>
    %cst = arith.constant dense<0.000000e+00> : vector<32x384xf32>
    %6 = tpu.matmul %5, %4, %cst {dimension_numbers = #tpu.dot_dimension_numbers<[1], [0], [0], [1], [0, 0, 1, 1], [], []>} : vector<32x8xbf16>, vector<8x384xbf16>, vector<32x384xf32> -> vector<32x384xf32>
    %7 = vector.broadcast %0 : vector<32x1xf32> to vector<32x384xf32>
    %8 = arith.addf %6, %7 : vector<32x384xf32>
    %cst_8 = arith.constant 0.000000e+00 : f32
    %9 = vector.broadcast %cst_8 : f32 to vector<32x384xf32>
    %10 = arith.maximumf %8, %9 : vector<32x384xf32>
    %c0_9 = arith.constant 0 : index
    %c0_10 = arith.constant 0 : index
    %11 = vector.load %arg3[%c0_9, %c0_10] : memref<32x32xbf16, #tpu.memory_space<vmem>>, vector<32x32xbf16>
    %12 = arith.truncf %10 : vector<32x384xf32> to vector<32x384xbf16>
    %cst_11 = arith.constant dense<0.000000e+00> : vector<32x384xf32>
    %13 = tpu.matmul %11, %12, %cst_11 {dimension_numbers = #tpu.dot_dimension_numbers<[1], [0], [0], [1], [0, 0, 1, 1], [], []>} : vector<32x32xbf16>, vector<32x384xbf16>, vector<32x384xf32> -> vector<32x384xf32>
    %14 = vector.broadcast %1 : vector<32x1xf32> to vector<32x384xf32>
    %15 = arith.addf %13, %14 : vector<32x384xf32>
    %cst_12 = arith.constant 0.000000e+00 : f32
    %16 = vector.broadcast %cst_12 : f32 to vector<32x384xf32>
    %17 = arith.maximumf %15, %16 : vector<32x384xf32>
    %c0_13 = arith.constant 0 : index
    %c0_14 = arith.constant 0 : index
    %18 = vector.load %arg4[%c0_13, %c0_14] : memref<32x32xbf16, #tpu.memory_space<vmem>>, vector<32x32xbf16>
    %19 = arith.truncf %17 : vector<32x384xf32> to vector<32x384xbf16>
    %cst_15 = arith.constant dense<0.000000e+00> : vector<32x384xf32>
    %20 = tpu.matmul %18, %19, %cst_15 {dimension_numbers = #tpu.dot_dimension_numbers<[1], [0], [0], [1], [0, 0, 1, 1], [], []>} : vector<32x32xbf16>, vector<32x384xbf16>, vector<32x384xf32> -> vector<32x384xf32>
    %21 = vector.broadcast %2 : vector<32x1xf32> to vector<32x384xf32>
    %22 = arith.addf %20, %21 : vector<32x384xf32>
    %cst_16 = arith.constant 0.000000e+00 : f32
    %23 = vector.broadcast %cst_16 : f32 to vector<32x384xf32>
    %24 = arith.maximumf %22, %23 : vector<32x384xf32>
    %c0_17 = arith.constant 0 : index
    %c0_18 = arith.constant 0 : index
    %25 = vector.load %arg5[%c0_17, %c0_18] : memref<8x32xbf16, #tpu.memory_space<vmem>>, vector<8x32xbf16>
    %26 = arith.truncf %24 : vector<32x384xf32> to vector<32x384xbf16>
    %cst_19 = arith.constant dense<0.000000e+00> : vector<8x384xf32>
    %27 = tpu.matmul %25, %26, %cst_19 {dimension_numbers = #tpu.dot_dimension_numbers<[1], [0], [0], [1], [0, 0, 1, 1], [], []>} : vector<8x32xbf16>, vector<32x384xbf16>, vector<8x384xf32> -> vector<8x384xf32>
    %28 = vector.broadcast %3 : vector<8x1xf32> to vector<8x384xf32>
    %29 = arith.addf %27, %28 : vector<8x384xf32>
    %c0_20 = arith.constant 0 : index
    %c0_21 = arith.constant 0 : index
    %30 = vector.load %arg7[%c0_20, %c0_21] : memref<8x384xf32, #tpu.memory_space<vmem>>, vector<8x384xf32>
    tpu.vector_store %arg7[%c0_20, %c0_21], %29 {strides = array<i32>} : memref<8x384xf32, #tpu.memory_space<vmem>>, vector<8x384xf32>,
    return
  }
  func.func @transform_0(%arg0: i32) -> (i32, i32) {
    %c0_i32 = arith.constant 0 : i32
    %c0_i32_0 = arith.constant 0 : i32
    return %c0_i32, %arg0 : i32, i32
  }
  func.func @transform_1(%arg0: i32) -> (i32, i32) {
    %c0_i32 = arith.constant 0 : i32
    %c0_i32_0 = arith.constant 0 : i32
    %c0_i32_1 = arith.constant 0 : i32
    return %c0_i32, %c0_i32_0 : i32, i32
  }
  func.func @transform_2(%arg0: i32) -> (i32, i32) {
    %c0_i32 = arith.constant 0 : i32
    %c0_i32_0 = arith.constant 0 : i32
    %c0_i32_1 = arith.constant 0 : i32
    return %c0_i32, %c0_i32_0 : i32, i32
  }
  func.func @transform_3(%arg0: i32) -> (i32, i32) {
    %c0_i32 = arith.constant 0 : i32
    %c0_i32_0 = arith.constant 0 : i32
    %c0_i32_1 = arith.constant 0 : i32
    return %c0_i32, %c0_i32_0 : i32, i32
  }
  func.func @transform_4(%arg0: i32) -> (i32, i32) {
    %c0_i32 = arith.constant 0 : i32
    %c0_i32_0 = arith.constant 0 : i32
    %c0_i32_1 = arith.constant 0 : i32
    return %c0_i32, %c0_i32_0 : i32, i32
  }
  func.func @transform_5(%arg0: i32) -> (i32, i32) {
    %c0_i32 = arith.constant 0 : i32
    %c0_i32_0 = arith.constant 0 : i32
    %c0_i32_1 = arith.constant 0 : i32
    return %c0_i32, %c0_i32_0 : i32, i32
  }
  func.func @transform_6(%arg0: i32) -> (i32, i32) {
    %c0_i32 = arith.constant 0 : i32
    %c0_i32_0 = arith.constant 0 : i32
    return %c0_i32, %arg0 : i32, i32
  }
}

</mosaic_0001>

<llo_original>
// kernel: mlp_forward_featmajor.1
$region0: #{mlp_forward_featmajor.1}
  #allocation0 [shape = 'u32[]', space=smem, size = 0x4, offset = 0x4, fixed_abs, tag = 'smem constant byte address 0x4 - core index']
  #allocation1 [shape = 'u32[72,128]{1,0:T(1,128)}', space=vmem, size = 0x9000, scoped, tag = 'internal scratch']
  %s0 = inlined_call_operand.vmem [shape: bf16[8,384], index: 0, kind: input, shape index: {}]
  %s1 = inlined_call_operand.vmem [shape: bf16[32,8], index: 1, kind: input, shape index: {}]
  %s2 = inlined_call_operand.vmem [shape: bf16[32,32], index: 2, kind: input, shape index: {}]
  %s3 = inlined_call_operand.vmem [shape: bf16[32,32], index: 3, kind: input, shape index: {}]
  %s4 = inlined_call_operand.vmem [shape: bf16[8,32], index: 4, kind: input, shape index: {}]
  %s5 = inlined_call_operand.vmem [shape: f32[104,1], index: 5, kind: input, shape index: {}]
  %s6 = inlined_call_operand.vmem [shape: f32[8,384], index: 6, kind: output, shape index: {}]
  %s7 = sld [smem:[#allocation0]]
  $region34: #{mlp_forward_featmajor.1} parent=0
    _
  %s9 = ssub.s32 1, %s7
  %s10 = scalar_select 0, %s9, %s7
  // Predicated region
  $region2: #{mlp_forward_featmajor.1} parent=0 // pred_check
    _
  $region3: #{mlp_forward_featmajor.1} parent=0 // pred_check_branch
    %12 = sbr.rel (0) target = $region5
  $region4: #{mlp_forward_featmajor.1} parent=0 // pred_region
    _
  $region5: #{mlp_forward_featmajor.1} parent=0 // pred_fallthru
    _
  // Predicated region
  $region6: #{mlp_forward_featmajor.1} parent=0 // pred_check
    _
  $region7: #{mlp_forward_featmajor.1} parent=0 // pred_check_branch
    %14 = sbr.rel (0) target = $region9
  $region8: #{mlp_forward_featmajor.1} parent=0 // pred_region
    _
  $region9: #{mlp_forward_featmajor.1} parent=0 // pred_fallthru
    _
  // Predicated region
  $region10: #{mlp_forward_featmajor.1} parent=0 // pred_check
    _
  $region11: #{mlp_forward_featmajor.1} parent=0 // pred_check_branch
    %16 = sbr.rel (0) target = $region13
  $region12: #{mlp_forward_featmajor.1} parent=0 // pred_region
    _
  $region13: #{mlp_forward_featmajor.1} parent=0 // pred_fallthru
    _
  // Predicated region
  $region14: #{mlp_forward_featmajor.1} parent=0 // pred_check
    _
  $region15: #{mlp_forward_featmajor.1} parent=0 // pred_check_branch
    %18 = sbr.rel (0) target = $region17
  $region16: #{mlp_forward_featmajor.1} parent=0 // pred_region
    _
  $region17: #{mlp_forward_featmajor.1} parent=0 // pred_fallthru
    _
  // Predicated region
  $region18: #{mlp_forward_featmajor.1} parent=0 // pred_check
    _
  $region19: #{mlp_forward_featmajor.1} parent=0 // pred_check_branch
    %20 = sbr.rel (0) target = $region21
  $region20: #{mlp_forward_featmajor.1} parent=0 // pred_region
    _
  $region21: #{mlp_forward_featmajor.1} parent=0 // pred_fallthru
    _
  // Predicated region
  $region22: #{mlp_forward_featmajor.1} parent=0 // pred_check
    _
  $region23: #{mlp_forward_featmajor.1} parent=0 // pred_check_branch
    %22 = sbr.rel (0) target = $region25
  $region24: #{mlp_forward_featmajor.1} parent=0 // pred_region
    _
  $region25: #{mlp_forward_featmajor.1} parent=0 // pred_fallthru
    _
  %v24 = vld [vmem:[%s5] sm:$0xff]
  %v25 = vld [vmem:[%s5 + $0x8] sm:$0xff]
  %v26 = vld [vmem:[%s5 + $0x10] sm:$0xff]
  %v27 = vld [vmem:[%s5 + $0x18] sm:$0xff]
  %v28 = vld [vmem:[%s5 + $0x20] sm:$0xff]
  %v29 = vld [vmem:[%s5 + $0x28] sm:$0xff]
  %v30 = vld [vmem:[%s5 + $0x30] sm:$0xff]
  %v31 = vld [vmem:[%s5 + $0x38] sm:$0xff]
  %v32 = vld [vmem:[%s5 + $0x40] sm:$0xff]
  %v33 = vld [vmem:[%s5 + $0x48] sm:$0xff]
  %v34 = vld [vmem:[%s5 + $0x50] sm:$0xff]
  %v35 = vld [vmem:[%s5 + $0x58] sm:$0xff]
  %v36 = vld [vmem:[%s5 + $0x60] sm:$0xff]
  %v37 = vld [vmem:[%s0] sm:$0xff]
  %v38 = vld [vmem:[%s0 + $0x8] sm:$0xf]
  %v39 = vld [vmem:[%s1] sm:$0xf]
  %v40 = vld [vmem:[%s1 + $0x4] sm:$0xf]
  %v41 = vld [vmem:[%s1 + $0x8] sm:$0xf]
  %v42 = vld [vmem:[%s1 + $0xc] sm:$0xf]
  %44 = vset.pattern.permute.xlu0 0
  %45 = vperm.xlu0 %44, %v24
  %v46 = vpop.permute.xlu0 %45
  %49 = vset.pattern.permute.xlu0 0
  %50 = vperm.xlu0 %49, %v25
  %v51 = vpop.permute.xlu0 %50
  %54 = vset.pattern.permute.xlu0 0
  %55 = vperm.xlu0 %54, %v26
  %v56 = vpop.permute.xlu0 %55
  %59 = vset.pattern.permute.xlu0 0
  %60 = vperm.xlu0 %59, %v27
  %v61 = vpop.permute.xlu0 %60
  %v67 = vunpack.c.l.b16 %v39
  %v68 = vunpack.c.l.b16 %v40
  %v69 = vunpack.c.l.b16 %v41
  %v70 = vunpack.c.l.b16 %v42
  %v71 = vpack.c.b16 %v68, %v67
  %v72 = vpack.c.b16 %v70, %v69
  %v75 = vunpack.c.l.b16 %v37
  %v76 = vunpack.c.h.b16 %v37
  %v77 = vunpack.c.l.b16 %v38
  %v78 = vpack.c.b16 %v75, %v75
  %v79 = vpack.c.b16 %v76, %v76
  %v80 = vpack.c.b16 %v77, %v77
  %vm81 = vcmask 64512
  %v83 = vsel %vm81, %v71, 0
  %v86 = vsel %vm81, %v72, 0
  %vm88 = vcmask 1043456
  %v90 = vsel %vm88, %v78, 0
  %v93 = vsel %vm88, %v79, 0
  %v96 = vsel %vm88, %v80, 0
  %98 = vmatpush.bf16.msra.mxu0 0
  %99 = vmatpush.bf16.msra.mxu0 0
  %100 = vmatpush.bf16.msra.mxu0 0
  %101 = vmatpush.bf16.msra.mxu0 0
  %102 = vmatpush.bf16.msra.mxu0 0
  %103 = vmatpush.bf16.msra.mxu0 0
  %104 = vmatpush.bf16.msra.mxu0 0
  %105 = vmatpush.bf16.msra.mxu0 %v90
  %106 = vmatmul.bf16.gmra.mxu0 %v83
  %v107 = vpop.f32.mrf.mxu0
  %v108 = vadd.f32 %v46, %v107
  %v109 = vpop.f32.mrf.mxu0
  %v110 = vadd.f32 %v51, %v109
  %111 = vmatmul.bf16.gmra.mxu0 %v86
  %v112 = vpop.f32.mrf.mxu0
  %v113 = vadd.f32 %v56, %v112
  %v114 = vpop.f32.mrf.mxu0
  %v115 = vadd.f32 %v61, %v114
  %116 = vdwg.mxu0
  %117 = vmatpush.bf16.msra.mxu0 0
  %118 = vmatpush.bf16.msra.mxu0 0
  %119 = vmatpush.bf16.msra.mxu0 0
  %120 = vmatpush.bf16.msra.mxu0 0
  %121 = vmatpush.bf16.msra.mxu0 0
  %122 = vmatpush.bf16.msra.mxu0 0
  %123 = vmatpush.bf16.msra.mxu0 0
  %124 = vmatpush.bf16.msra.mxu0 %v93
  %125 = vmatmul.bf16.gmra.mxu0 %v83
  %v126 = vpop.f32.mrf.mxu0
  %v127 = vadd.f32 %v46, %v126
  %v128 = vpop.f32.mrf.mxu0
  %v129 = vadd.f32 %v51, %v128
  %130 = vmatmul.bf16.gmra.mxu0 %v86
  %v131 = vpop.f32.mrf.mxu0
  %v132 = vadd.f32 %v56, %v131
  %v133 = vpop.f32.mrf.mxu0
  %v134 = vadd.f32 %v61, %v133
  %135 = vdwg.mxu0
  %136 = vmatpush.bf16.msra.mxu0 0
  %137 = vmatpush.bf16.msra.mxu0 0
  %138 = vmatpush.bf16.msra.mxu0 0
  %139 = vmatpush.bf16.msra.mxu0 0
  %140 = vmatpush.bf16.msra.mxu0 0
  %141 = vmatpush.bf16.msra.mxu0 0
  %142 = vmatpush.bf16.msra.mxu0 0
  %143 = vmatpush.bf16.msra.mxu0 %v96
  %144 = vmatmul.bf16.gmra.mxu0 %v83
  %v145 = vpop.f32.mrf.mxu0
  %v146 = vadd.f32 %v46, %v145
  %v147 = vpop.f32.mrf.mxu0
  %v148 = vadd.f32 %v51, %v147
  %149 = vmatmul.bf16.gmra.mxu0 %v86
  %v150 = vpop.f32.mrf.mxu0
  %v151 = vadd.f32 %v56, %v150
  %v152 = vpop.f32.mrf.mxu0
  %v153 = vadd.f32 %v61, %v152
  %154 = vdwg.mxu0
  %v155 = vmax.f32 %v108, 0.0
  %v156 = vmax.f32 %v127, 0.0
  %v157 = vmax.f32 %v146, 0.0
  %v158 = vmax.f32 %v110, 0.0
  %v159 = vmax.f32 %v129, 0.0
  %v160 = vmax.f32 %v148, 0.0
  %v161 = vmax.f32 %v113, 0.0
  %v162 = vmax.f32 %v132, 0.0
  %v163 = vmax.f32 %v151, 0.0
  %v164 = vmax.f32 %v115, 0.0
  %v165 = vmax.f32 %v134, 0.0
  %v166 = vmax.f32 %v153, 0.0
  %v167 = vld [vmem:[%s2] sm:$0xf]
  %v168 = vld [vmem:[%s2 + $0x4] sm:$0xf]
  %v169 = vld [vmem:[%s2 + $0x8] sm:$0xf]
  %v170 = vld [vmem:[%s2 + $0xc] sm:$0xf]
  %v171 = vpack.c.bf16 %v158, %v155
  %v172 = vpack.c.bf16 %v159, %v156
  %v173 = vpack.c.bf16 %v160, %v157
  %v174 = vpack.c.bf16 %v164, %v161
  %v175 = vpack.c.bf16 %v165, %v162
  %v176 = vpack.c.bf16 %v166, %v163
  %178 = vset.pattern.permute.xlu0 0
  %179 = vperm.xlu0 %178, %v28
  %v180 = vpop.permute.xlu0 %179
  %183 = vset.pattern.permute.xlu0 0
  %184 = vperm.xlu0 %183, %v29
  %v185 = vpop.permute.xlu0 %184
  %188 = vset.pattern.permute.xlu0 0
  %189 = vperm.xlu0 %188, %v30
  %v190 = vpop.permute.xlu0 %189
  %193 = vset.pattern.permute.xlu0 0
  %194 = vperm.xlu0 %193, %v31
  %v195 = vpop.permute.xlu0 %194
  %v201 = vunpack.c.l.b16 %v167
  %v202 = vunpack.c.l.b16 %v168
  %v203 = vunpack.c.l.b16 %v169
  %v204 = vunpack.c.l.b16 %v170
  %v205 = vpack.c.b16 %v202, %v201
  %v206 = vpack.c.b16 %v204, %v203
  %vm207 = vcmask 261120
  %v209 = vsel %vm207, %v205, 0
  %v212 = vsel %vm207, %v206, 0
  %214 = vmatpush.bf16.msra.mxu0 0
  %215 = vmatpush.bf16.msra.mxu0 0
  %216 = vmatpush.bf16.msra.mxu0 0
  %217 = vmatpush.bf16.msra.mxu0 0
  %218 = vmatpush.bf16.msra.mxu0 0
  %219 = vmatpush.bf16.msra.mxu0 0
  %220 = vmatpush.bf16.msra.mxu0 %v174
  %221 = vmatpush.bf16.msra.mxu0 %v171
  %222 = vmatmul.bf16.gmra.mxu0 %v209
  %v223 = vpop.f32.mrf.mxu0
  %v224 = vadd.f32 %v180, %v223
  %v225 = vpop.f32.mrf.mxu0
  %v226 = vadd.f32 %v185, %v225
  %227 = vmatmul.bf16.gmra.mxu0 %v212
  %v228 = vpop.f32.mrf.mxu0
  %v229 = vadd.f32 %v190, %v228
  %v230 = vpop.f32.mrf.mxu0
  %v231 = vadd.f32 %v195, %v230
  %232 = vdwg.mxu0
  %233 = vmatpush.bf16.msra.mxu0 0
  %234 = vmatpush.bf16.msra.mxu0 0
  %235 = vmatpush.bf16.msra.mxu0 0
  %236 = vmatpush.bf16.msra.mxu0 0
  %237 = vmatpush.bf16.msra.mxu0 0
  %238 = vmatpush.bf16.msra.mxu0 0
  %239 = vmatpush.bf16.msra.mxu0 %v175
  %240 = vmatpush.bf16.msra.mxu0 %v172
  %241 = vmatmul.bf16.gmra.mxu0 %v209
  %v242 = vpop.f32.mrf.mxu0
  %v243 = vadd.f32 %v180, %v242
  %v244 = vpop.f32.mrf.mxu0
  %v245 = vadd.f32 %v185, %v244
  %246 = vmatmul.bf16.gmra.mxu0 %v212
  %v247 = vpop.f32.mrf.mxu0
  %v248 = vadd.f32 %v190, %v247
  %v249 = vpop.f32.mrf.mxu0
  %v250 = vadd.f32 %v195, %v249
  %251 = vdwg.mxu0
  %252 = vmatpush.bf16.msra.mxu0 0
  %253 = vmatpush.bf16.msra.mxu0 0
  %254 = vmatpush.bf16.msra.mxu0 0
  %255 = vmatpush.bf16.msra.mxu0 0
  %256 = vmatpush.bf16.msra.mxu0 0
  %257 = vmatpush.bf16.msra.mxu0 0
  %258 = vmatpush.bf16.msra.mxu0 %v176
  %259 = vmatpush.bf16.msra.mxu0 %v173
  %260 = vmatmul.bf16.gmra.mxu0 %v209
  %v261 = vpop.f32.mrf.mxu0
  %v262 = vadd.f32 %v180, %v261
  %v263 = vpop.f32.mrf.mxu0
  %v264 = vadd.f32 %v185, %v263
  %265 = vmatmul.bf16.gmra.mxu0 %v212
  %v266 = vpop.f32.mrf.mxu0
  %v267 = vadd.f32 %v190, %v266
  %v268 = vpop.f32.mrf.mxu0
  %v269 = vadd.f32 %v195, %v268
  %270 = vdwg.mxu0
  %v271 = vmax.f32 %v224, 0.0
  %v272 = vmax.f32 %v243, 0.0
  %v273 = vmax.f32 %v262, 0.0
  %v274 = vmax.f32 %v226, 0.0
  %v275 = vmax.f32 %v245, 0.0
  %v276 = vmax.f32 %v264, 0.0
  %v277 = vmax.f32 %v229, 0.0
  %v278 = vmax.f32 %v248, 0.0
  %v279 = vmax.f32 %v267, 0.0
  %v280 = vmax.f32 %v231, 0.0
  %v281 = vmax.f32 %v250, 0.0
  %v282 = vmax.f32 %v269, 0.0
  %v283 = vld [vmem:[%s3] sm:$0xf]
  %v284 = vld [vmem:[%s3 + $0x4] sm:$0xf]
  %v285 = vld [vmem:[%s3 + $0x8] sm:$0xf]
  %v286 = vld [vmem:[%s3 + $0xc] sm:$0xf]
  %v287 = vpack.c.bf16 %v274, %v271
  %v288 = vpack.c.bf16 %v275, %v272
  %v289 = vpack.c.bf16 %v276, %v273
  %v290 = vpack.c.bf16 %v280, %v277
  %v291 = vpack.c.bf16 %v281, %v278
  %v292 = vpack.c.bf16 %v282, %v279
  %294 = vset.pattern.permute.xlu0 0
  %295 = vperm.xlu0 %294, %v32
  %v296 = vpop.permute.xlu0 %295
  %299 = vset.pattern.permute.xlu0 0
  %300 = vperm.xlu0 %299, %v33
  %v301 = vpop.permute.xlu0 %300
  %304 = vset.pattern.permute.xlu0 0
  %305 = vperm.xlu0 %304, %v34
  %v306 = vpop.permute.xlu0 %305
  %309 = vset.pattern.permute.xlu0 0
  %310 = vperm.xlu0 %309, %v35
  %v311 = vpop.permute.xlu0 %310
  %v317 = vunpack.c.l.b16 %v283
  %v318 = vunpack.c.l.b16 %v284
  %v319 = vunpack.c.l.b16 %v285
  %v320 = vunpack.c.l.b16 %v286
  %v321 = vpack.c.b16 %v318, %v317
  %v322 = vpack.c.b16 %v320, %v319
  %v324 = vsel %vm207, %v321, 0
  %v327 = vsel %vm207, %v322, 0
  %329 = vmatpush.bf16.msra.mxu0 0
  %330 = vmatpush.bf16.msra.mxu0 0
  %331 = vmatpush.bf16.msra.mxu0 0
  %332 = vmatpush.bf16.msra.mxu0 0
  %333 = vmatpush.bf16.msra.mxu0 0
  %334 = vmatpush.bf16.msra.mxu0 0
  %335 = vmatpush.bf16.msra.mxu0 %v290
  %336 = vmatpush.bf16.msra.mxu0 %v287
  %337 = vmatmul.bf16.gmra.mxu0 %v324
  %v338 = vpop.f32.mrf.mxu0
  %v339 = vadd.f32 %v296, %v338
  %v340 = vpop.f32.mrf.mxu0
  %v341 = vadd.f32 %v301, %v340
  %342 = vmatmul.bf16.gmra.mxu0 %v327
  %v343 = vpop.f32.mrf.mxu0
  %v344 = vadd.f32 %v306, %v343
  %v345 = vpop.f32.mrf.mxu0
  %v346 = vadd.f32 %v311, %v345
  %347 = vdwg.mxu0
  %348 = vmatpush.bf16.msra.mxu0 0
  %349 = vmatpush.bf16.msra.mxu0 0
  %350 = vmatpush.bf16.msra.mxu0 0
  %351 = vmatpush.bf16.msra.mxu0 0
  %352 = vmatpush.bf16.msra.mxu0 0
  %353 = vmatpush.bf16.msra.mxu0 0
  %354 = vmatpush.bf16.msra.mxu0 %v291
  %355 = vmatpush.bf16.msra.mxu0 %v288
  %356 = vmatmul.bf16.gmra.mxu0 %v324
  %v357 = vpop.f32.mrf.mxu0
  %v358 = vadd.f32 %v296, %v357
  %v359 = vpop.f32.mrf.mxu0
  %v360 = vadd.f32 %v301, %v359
  %361 = vmatmul.bf16.gmra.mxu0 %v327
  %v362 = vpop.f32.mrf.mxu0
  %v363 = vadd.f32 %v306, %v362
  %v364 = vpop.f32.mrf.mxu0
  %v365 = vadd.f32 %v311, %v364
  %366 = vdwg.mxu0
  %367 = vmatpush.bf16.msra.mxu0 0
  %368 = vmatpush.bf16.msra.mxu0 0
  %369 = vmatpush.bf16.msra.mxu0 0
  %370 = vmatpush.bf16.msra.mxu0 0
  %371 = vmatpush.bf16.msra.mxu0 0
  %372 = vmatpush.bf16.msra.mxu0 0
  %373 = vmatpush.bf16.msra.mxu0 %v292
  %374 = vmatpush.bf16.msra.mxu0 %v289
  %375 = vmatmul.bf16.gmra.mxu0 %v324
  %v376 = vpop.f32.mrf.mxu0
  %v377 = vadd.f32 %v296, %v376
  %v378 = vpop.f32.mrf.mxu0
  %v379 = vadd.f32 %v301, %v378
  %380 = vmatmul.bf16.gmra.mxu0 %v327
  %v381 = vpop.f32.mrf.mxu0
  %v382 = vadd.f32 %v306, %v381
  %v383 = vpop.f32.mrf.mxu0
  %v384 = vadd.f32 %v311, %v383
  %385 = vdwg.mxu0
  %v386 = vmax.f32 %v339, 0.0
  %v387 = vmax.f32 %v358, 0.0
  %v388 = vmax.f32 %v377, 0.0
  %v389 = vmax.f32 %v341, 0.0
  %v390 = vmax.f32 %v360, 0.0
  %v391 = vmax.f32 %v379, 0.0
  %v392 = vmax.f32 %v344, 0.0
  %v393 = vmax.f32 %v363, 0.0
  %v394 = vmax.f32 %v382, 0.0
  %v395 = vmax.f32 %v346, 0.0
  %v396 = vmax.f32 %v365, 0.0
  %v397 = vmax.f32 %v384, 0.0
  %v398 = vld [vmem:[%s4] sm:$0xf]
  %v399 = vpack.c.bf16 %v389, %v386
  %v400 = vpack.c.bf16 %v390, %v387
  %v401 = vpack.c.bf16 %v391, %v388
  %v402 = vpack.c.bf16 %v395, %v392
  %v403 = vpack.c.bf16 %v396, %v393
  %v404 = vpack.c.bf16 %v397, %v394
  %406 = vset.pattern.permute.xlu0 0
  %407 = vperm.xlu0 %406, %v36
  %v408 = vpop.permute.xlu0 %407
  %v411 = vsel %vm207, %v398, 0
  %413 = vmatpush.bf16.msra.mxu0 0
  %414 = vmatpush.bf16.msra.mxu0 0
  %415 = vmatpush.bf16.msra.mxu0 0
  %416 = vmatpush.bf16.msra.mxu0 0
  %417 = vmatpush.bf16.msra.mxu0 0
  %418 = vmatpush.bf16.msra.mxu0 0
  %419 = vmatpush.bf16.msra.mxu0 %v402
  %420 = vmatpush.bf16.msra.mxu0 %v399
  %421 = vmatmul.bf16.gmra.mxu0 %v411
  %v422 = vpop.f32.mrf.mxu0
  %v423 = vadd.f32 %v408, %v422
  %v424 = vpop.f32.mrf.mxu0
  %425 = vdwg.mxu0
  %426 = vmatpush.bf16.msra.mxu0 0
  %427 = vmatpush.bf16.msra.mxu0 0
  %428 = vmatpush.bf16.msra.mxu0 0
  %429 = vmatpush.bf16.msra.mxu0 0
  %430 = vmatpush.bf16.msra.mxu0 0
  %431 = vmatpush.bf16.msra.mxu0 0
  %432 = vmatpush.bf16.msra.mxu0 %v403
  %433 = vmatpush.bf16.msra.mxu0 %v400
  %434 = vmatmul.bf16.gmra.mxu0 %v411
  %v435 = vpop.f32.mrf.mxu0
  %v436 = vadd.f32 %v408, %v435
  %v437 = vpop.f32.mrf.mxu0
  %438 = vdwg.mxu0
  %439 = vmatpush.bf16.msra.mxu0 0
  %440 = vmatpush.bf16.msra.mxu0 0
  %441 = vmatpush.bf16.msra.mxu0 0
  %442 = vmatpush.bf16.msra.mxu0 0
  %443 = vmatpush.bf16.msra.mxu0 0
  %444 = vmatpush.bf16.msra.mxu0 0
  %445 = vmatpush.bf16.msra.mxu0 %v404
  %446 = vmatpush.bf16.msra.mxu0 %v401
  %447 = vmatmul.bf16.gmra.mxu0 %v411
  %v448 = vpop.f32.mrf.mxu0
  %v449 = vadd.f32 %v408, %v448
  %v450 = vpop.f32.mrf.mxu0
  %451 = vdwg.mxu0
  %452 = vst [vmem:[%s6] sm:$0xff] %v423
  %453 = vst [vmem:[%s6 + $0x8] sm:$0xff] %v436
  %454 = vst [vmem:[%s6 + $0x10] sm:$0xff] %v449
  // Predicated region
  $region26: #{mlp_forward_featmajor.1} parent=0 // pred_check
    _
  $region27: #{mlp_forward_featmajor.1} parent=0 // pred_check_branch
    %456 = sbr.rel (0) target = $region29
  $region28: #{mlp_forward_featmajor.1} parent=0 // pred_region
    _
  $region29: #{mlp_forward_featmajor.1} parent=0 // pred_fallthru
    _
  // Predicated region
  $region30: #{mlp_forward_featmajor.1} parent=0 // pred_check
    _
  $region31: #{mlp_forward_featmajor.1} parent=0 // pred_check_branch
    %458 = sbr.rel (0) target = $region33
  $region32: #{mlp_forward_featmajor.1} parent=0 // pred_region
    _
  $region33: #{mlp_forward_featmajor.1} parent=0 // pred_fallthru
    _

</llo_original>
